<compile_context>
chip_gen: v6e
topology: v6e:2x2x1
jax: 0.10.0
libtpu: 0.0.40
codegen_flags: <defaults>
</compile_context>

<pallas_src>
import jax
import jax.numpy as jnp
from jax.experimental import pallas as pl
from jax.experimental.pallas import tpu as pltpu

_MAX_OUTSTANDING = 4          # max concurrent DMAs
_MIN_CHUNK_BYTES = 256 * 1024  # don't bother chunking below this per-chunk size


def _choose_chunks(dim0, bytes_per_row):
    """Static (start, size) chunks along the leading dim for outstanding DMAs."""
    if dim0 > 1:
        for cand in range(_MAX_OUTSTANDING, 1, -1):  # 4, 3, 2
            if dim0 % cand == 0 and (dim0 // cand) * bytes_per_row >= _MIN_CHUNK_BYTES:
                size = dim0 // cand
                return [(i * size, size) for i in range(cand)]
    return [(0, dim0)]


def _make_identity_kernel(chunks):
    """Kernel: chunked HBM->HBM DMA copy of x_ref into o_ref (pure pass-through)."""
    def kernel(x_ref, o_ref, sems):
        if len(chunks) == 1:
            cp = pltpu.make_async_copy(x_ref, o_ref, sems.at[0])
            cp.start()
            cp.wait()
            return
        copies = []
        for idx, (start, size) in enumerate(chunks):  # static Python loop
            cp = pltpu.make_async_copy(
                x_ref.at[pl.ds(start, size)],
                o_ref.at[pl.ds(start, size)],
                sems.at[idx],
            )
            cp.start()
            copies.append(cp)
        for cp in copies:
            cp.wait()
    return kernel


def identity(x):
    """Identity forward pass (y = x), routed through a Pallas HBM->HBM DMA copy."""
    # Awkward / degenerate cases: the correct result is the input itself.
    if x.size == 0 or x.ndim == 0:
        return x

    itemsize = jnp.dtype(x.dtype).itemsize
    bytes_per_row = (x.size // x.shape[0]) * itemsize
    chunks = _choose_chunks(x.shape[0], bytes_per_row)

    return pl.pallas_call(
        _make_identity_kernel(chunks),
        out_shape=jax.ShapeDtypeStruct(x.shape, x.dtype),
        in_specs=[pl.BlockSpec(memory_space=pl.ANY)],   # leave input in HBM
        out_specs=pl.BlockSpec(memory_space=pl.ANY),    # write output in HBM
        scratch_shapes=[pltpu.SemaphoreType.DMA((len(chunks),))],
        cost_estimate=pl.CostEstimate(
            flops=0,
            transcendentals=0,
            bytes_accessed=2 * x.size * itemsize,
        ),
    )(x)


if __name__ == "__main__":
    key = jax.random.PRNGKey(0)

    # Small NCHW input consistent with typical conv activations (single-DMA path).
    x_small = jax.random.normal(key, (2, 4, 16, 16), dtype=jnp.float32)
    y_small = jax.block_until_ready(identity(x_small))
    assert y_small.shape == x_small.shape and y_small.dtype == x_small.dtype
    assert jnp.array_equal(y_small, x_small), "Identity must return input unchanged"

    # Slightly larger input that exercises the chunked multi-DMA path
    # (1 MiB -> 4 outstanding 256 KiB DMAs).
    x_big = jax.random.normal(key, (8, 128, 256), dtype=jnp.float32)
    y_big = jax.block_until_ready(identity(x_big))
    assert y_big.shape == x_big.shape and y_big.dtype == x_big.dtype
    assert jnp.array_equal(y_big, x_big), "Identity must return input unchanged"

    print("KERNEL_OK")
</pallas_src>

<mosaic_0001>
module attributes {stable_mosaic.version = 11 : i64} {
  func.func @kernel(%arg0: memref<2x4x16x16xf32, #tpu.memory_space<any>>, %arg1: memref<2x4x16x16xf32, #tpu.memory_space<any>>, %arg2: memref<1x!tpu.dma_semaphore, #tpu.memory_space<semaphore_mem>>) attributes {dimension_semantics = [], scalar_prefetch = 0 : i64, scratch_operands = 1 : i64, tpu.core_type = #tpu.core_type<tc>} {
    %c0_i32 = arith.constant 0 : i32
    %0 = tpu.memref_slice %arg2[%c0_i32] : memref<1x!tpu.dma_semaphore, #tpu.memory_space<semaphore_mem>> -> memref<1x!tpu.dma_semaphore, #tpu.memory_space<semaphore_mem>>
    %1 = tpu.memref_squeeze %0 : memref<1x!tpu.dma_semaphore, #tpu.memory_space<semaphore_mem>> -> memref<!tpu.dma_semaphore, #tpu.memory_space<semaphore_mem>>
    tpu.enqueue_dma source(%arg0 : memref<2x4x16x16xf32, #tpu.memory_space<any>>) target(%arg1 : memref<2x4x16x16xf32, #tpu.memory_space<any>>) target_semaphore(%1 : memref<!tpu.dma_semaphore, #tpu.memory_space<semaphore_mem>>)
    %c0_i32_0 = arith.constant 0 : i32
    %2 = tpu.memref_slice %arg2[%c0_i32_0] : memref<1x!tpu.dma_semaphore, #tpu.memory_space<semaphore_mem>> -> memref<1x!tpu.dma_semaphore, #tpu.memory_space<semaphore_mem>>
    %3 = tpu.memref_squeeze %2 : memref<1x!tpu.dma_semaphore, #tpu.memory_space<semaphore_mem>> -> memref<!tpu.dma_semaphore, #tpu.memory_space<semaphore_mem>>
    tpu.wait_dma2 semaphore(%3 : memref<!tpu.dma_semaphore, #tpu.memory_space<semaphore_mem>>) src(%arg0 : memref<2x4x16x16xf32, #tpu.memory_space<any>>) dst(%arg1 : memref<2x4x16x16xf32, #tpu.memory_space<any>>)
    return
  }
}

</mosaic_0001>

<llo_original>
// kernel: tpu_custom_call.1
$region0: #{tpu_custom_call.1}
  #allocation0 [shape = 'u32[]', space=smem, size = 0x4, offset = 0x4, fixed_abs, tag = 'smem constant byte address 0x4 - core index']
  #allocation1 [shape = 'u32[144,128]{1,0:T(1,128)}', space=vmem, size = 0x12000, scoped, tag = 'internal scratch']
  #allocation2 [shape = 's32[1]{0}', space=sflag, size = 0x4, scoped, tag = 'scratch operand']
  #allocation3 [shape = 's32[]', space=sflag, size = 0x4, offset = 0, fixed_abs, tag = 'sflag constant byte address 0x0 - dummy sync flag']
  #allocation4 [shape = 'u32[0]{0}', space=smem, size = 0, offset = 0, fixed_abs, tag = 'smem constant byte address 0x0 - null']
  %s0 = inlined_call_operand.hbm [shape: f32[2,4,16,16], index: 0, kind: input, shape index: {}]
  %s1 = inlined_call_operand.hbm [shape: f32[2,4,16,16], index: 1, kind: output, shape index: {}]
  %s2 = sld [smem:[#allocation0]]
  $region2: #{tpu_custom_call.1} parent=0
    _
  %s4 = ssub.s32 1, %s2
  %s5 = scalar_select 0, %s4, %s2
  %s7 = sshll.u32 1, 14
  %s8 = sxor.u32 4294967295, %s7
  %12 = dma.general %s0, 2048, %s1, [#allocation2], 131072, [#allocation4], 0, 0
  %s13 = smul.u32 2, 4
  %s14 = smul.u32 %s13, 16
  %s15 = smul.u32 %s14, 1
  %s16 = sshll.u32 %s15, 4
  %17 = dma.done [#allocation2], %s16
  %18 = vsyncmov [#allocation2]
  %s19 = vpop.sfrf %18
  %p20 = scmp.eq.s32.totalorder %s19, 0
  %p21 = pneg %p20
  %23 = shalt.err (%p21)

</llo_original>
